<compile_context>
chip_gen: v6e
topology: v6e:2x2x1
jax: 0.10.0
libtpu: 0.0.40
codegen_flags: <defaults>
</compile_context>

<pallas_src>
import math
from functools import partial

import jax
import jax.numpy as jnp
import numpy as np
from jax.experimental import pallas as pl
from jax.experimental.pallas import tpu as pltpu

LANE = 128
SUBLANE = 8

_VMEM = pl.BlockSpec(memory_space=pltpu.MemorySpace.VMEM)


def _round_up(n, m):
    return ((n + m - 1) // m) * m


def _pad2(a, rows, cols):
    r, c = a.shape
    return jnp.pad(a, ((0, rows - r), (0, cols - c)))


# ------------------------------ Pallas kernels ------------------------------ #
def _fused_det_kernel(x_ref, w1t_ref, b1_ref, w2t_ref, b2_ref, out_ref):
    """Deterministic forward (sample=False): eps == 0 so the std path vanishes."""
    x = x_ref[...]
    h = jnp.dot(x, w1t_ref[...], preferred_element_type=jnp.float32) + b1_ref[...]
    h = jnp.maximum(h, 0.0)                                   # fused ReLU
    y = jnp.dot(h, w2t_ref[...], preferred_element_type=jnp.float32) + b2_ref[...]
    out_ref[...] = y.astype(out_ref.dtype)


def _fused_sample_kernel(x_ref, w1t_ref, w1v_ref, b1_ref,
                         w2t_ref, w2v_ref, b2_ref,
                         eps1_ref, eps2_ref, out_ref):
    """Sampling forward: out = mean + std * eps.

    w1v/w2v already contain exp(log_alpha) * (W*W)^T, so
        var = (x*x) @ w1v      (no extra scalar multiply in-kernel).
    Padded weight rows/cols are zero, so garbage in padded hidden lanes is
    annihilated by the zero rows of w2t/w2v.
    """
    x = x_ref[...]
    # layer 1: mean + std*eps, fused ReLU
    mean1 = jnp.dot(x, w1t_ref[...], preferred_element_type=jnp.float32) + b1_ref[...]
    var1 = jnp.dot(x * x, w1v_ref[...], preferred_element_type=jnp.float32)
    std1 = jnp.sqrt(1e-16 + var1)
    h = jnp.maximum(mean1 + std1 * eps1_ref[...], 0.0)

    # layer 2: mean + std*eps
    mean2 = jnp.dot(h, w2t_ref[...], preferred_element_type=jnp.float32) + b2_ref[...]
    var2 = jnp.dot(h * h, w2v_ref[...], preferred_element_type=jnp.float32)
    std2 = jnp.sqrt(1e-16 + var2)
    out_ref[...] = (mean2 + std2 * eps2_ref[...]).astype(out_ref.dtype)


# ------------------------------ plain-JAX glue ------------------------------ #
def kl_loss(w, log_alpha):
    # W.nelement() * 0.5*sum(log1p(exp(-log_alpha))) / log_alpha.nelement()
    # softplus(-log_alpha) == log1p(exp(-log_alpha)), numerically robust.
    kl = 0.5 * jnp.sum(jax.nn.softplus(-log_alpha))
    return w.size * kl / log_alpha.size


def init_vd_linear(key, n_in, n_out):
    stdv = 1.0 / math.sqrt(n_in)
    w = jax.random.uniform(key, (n_out, n_in), jnp.float32, minval=-stdv, maxval=stdv)
    log_alpha = jnp.full((1, 1), -5.0, jnp.float32)
    bias = jnp.zeros((1, n_out), jnp.float32)
    return {"W": w, "log_alpha": log_alpha, "bias": bias}


def prepare_params(params, input_dim):
    """One-time layout prep: transpose, fold exp(log_alpha) into squared weights,
    zero-pad N dims to lane-dense 128 multiples.  Contraction dim of layer 1 is
    left at input_dim (full-array block)."""
    p1, p2 = params["bfc1"], params["bfc2"]
    n_hid, n_out = p1["W"].shape[0], p2["W"].shape[0]
    hid_pad = _round_up(n_hid, LANE)
    out_pad = _round_up(n_out, LANE)
    ea1 = jnp.exp(p1["log_alpha"]).reshape(())
    ea2 = jnp.exp(p2["log_alpha"]).reshape(())
    prep = {
        "w1t":  _pad2(p1["W"].T, input_dim, hid_pad),                 # (in, hid_pad)
        "w1v":  _pad2(ea1 * (p1["W"] * p1["W"]).T, input_dim, hid_pad),
        "b1":   _pad2(p1["bias"], 1, hid_pad),
        "w2t":  _pad2(p2["W"].T, hid_pad, out_pad),                   # (hid_pad, out_pad)
        "w2v":  _pad2(ea2 * (p2["W"] * p2["W"]).T, hid_pad, out_pad),
        "b2":   _pad2(p2["bias"], 1, out_pad),
    }
    return {**params, "prepared": prep}


@partial(jax.jit, static_argnames=("input_dim", "sample"))
def vd_linear_1L_forward(params, x, key, input_dim, sample=False):
    """Mirror of vd_linear_1L.forward: returns (y, total_kl).  Fully jitted."""
    x = x.reshape(-1, input_dim).astype(jnp.float32)
    B = x.shape[0]
    prep = params["prepared"]
    n_out = params["bfc2"]["W"].shape[0]

    B_pad = _round_up(B, SUBLANE)
    hid_pad = prep["w1t"].shape[1]
    out_pad = prep["w2t"].shape[1]
    x_pad = _pad2(x, B_pad, input_dim)     # only batch rows padded (to sublane 8)

    if sample:
        k1, k2 = jax.random.split(key)
        eps1 = jax.random.normal(k1, (B_pad, hid_pad), jnp.float32)
        eps2 = jax.random.normal(k2, (B_pad, out_pad), jnp.float32)
        y_pad = pl.pallas_call(
            _fused_sample_kernel,
            out_shape=jax.ShapeDtypeStruct((B_pad, out_pad), jnp.float32),
            in_specs=[_VMEM] * 9,
            out_specs=_VMEM,
        )(x_pad, prep["w1t"], prep["w1v"], prep["b1"],
          prep["w2t"], prep["w2v"], prep["b2"], eps1, eps2)
    else:
        y_pad = pl.pallas_call(
            _fused_det_kernel,
            out_shape=jax.ShapeDtypeStruct((B_pad, out_pad), jnp.float32),
            in_specs=[_VMEM] * 5,
            out_specs=_VMEM,
        )(x_pad, prep["w1t"], prep["b1"], prep["w2t"], prep["b2"])

    y = y_pad[:B, :n_out]
    tkl = (kl_loss(params["bfc1"]["W"], params["bfc1"]["log_alpha"])
           + kl_loss(params["bfc2"]["W"], params["bfc2"]["log_alpha"]))
    return y, tkl


# ---------------------------------- main ------------------------------------ #
if __name__ == "__main__":
    input_dim, output_dim, n_hid = 32, 10, 50
    batch = 8

    key = jax.random.PRNGKey(0)
    kx, k1, k2, ks = jax.random.split(key, 4)

    params = {
        "bfc1": init_vd_linear(k1, input_dim, n_hid),
        "bfc2": init_vd_linear(k2, n_hid, output_dim),
    }
    params = prepare_params(params, input_dim)
    x = jax.random.normal(kx, (batch, input_dim), jnp.float32)

    # --- deterministic forward (sample=False) must equal a plain-JAX reference ---
    y, tkl = vd_linear_1L_forward(params, x, ks, input_dim, sample=False)
    jax.block_until_ready((y, tkl))

    def reference_det(params, x):
        p1, p2 = params["bfc1"], params["bfc2"]
        h = jnp.maximum(x @ p1["W"].T + p1["bias"], 0.0)
        return h @ p2["W"].T + p2["bias"]

    y_ref = reference_det(params, x)
    assert y.shape == (batch, output_dim)
    np.testing.assert_allclose(np.asarray(y), np.asarray(y_ref), rtol=2e-2, atol=2e-2)
    assert jnp.isfinite(tkl)

    # --- sampling forward: compare against a plain-JAX reference that replays the
    #     exact same epsilon draws (same key splits / padded shapes) ---
    y_s, tkl_s = vd_linear_1L_forward(params, x, ks, input_dim, sample=True)
    jax.block_until_ready((y_s, tkl_s))
    assert y_s.shape == (batch, output_dim)
    assert jnp.isfinite(y_s).all() and jnp.isfinite(tkl_s)

    def reference_sample(params, x, key):
        p1, p2 = params["bfc1"], params["bfc2"]
        B_pad = _round_up(x.shape[0], SUBLANE)
        hid_pad = _round_up(p1["W"].shape[0], LANE)
        out_pad = _round_up(p2["W"].shape[0], LANE)
        ka, kb = jax.random.split(key)
        e1 = jax.random.normal(ka, (B_pad, hid_pad), jnp.float32)[:x.shape[0], :p1["W"].shape[0]]
        e2 = jax.random.normal(kb, (B_pad, out_pad), jnp.float32)[:x.shape[0], :p2["W"].shape[0]]

        def layer(p, xx, eps):
            mean = xx @ p["W"].T + p["bias"]
            var = (xx * xx) @ (jnp.exp(p["log_alpha"]) * p["W"] * p["W"]).T
            return mean + jnp.sqrt(1e-16 + var) * eps

        h = jnp.maximum(layer(p1, x, e1), 0.0)
        return layer(p2, h, e2)

    y_s_ref = reference_sample(params, x, ks)
    np.testing.assert_allclose(np.asarray(y_s), np.asarray(y_s_ref), rtol=2e-2, atol=2e-2)

    print("KERNEL_OK")
</pallas_src>

<mosaic_0001>
module attributes {stable_mosaic.version = 11 : i64} {
  func.func @_fused_det_kernel(%arg0: memref<8x32xf32, #tpu.memory_space<vmem>>, %arg1: memref<32x128xf32, #tpu.memory_space<vmem>>, %arg2: memref<1x128xf32, #tpu.memory_space<vmem>>, %arg3: memref<128x128xf32, #tpu.memory_space<vmem>>, %arg4: memref<1x128xf32, #tpu.memory_space<vmem>>, %arg5: memref<8x128xf32, #tpu.memory_space<vmem>>) attributes {dimension_semantics = [], scalar_prefetch = 0 : i64, scratch_operands = 0 : i64, tpu.core_type = #tpu.core_type<tc>} {
    %c0 = arith.constant 0 : index
    %c0_0 = arith.constant 0 : index
    %0 = vector.load %arg0[%c0, %c0_0] : memref<8x32xf32, #tpu.memory_space<vmem>>, vector<8x32xf32>
    %c0_1 = arith.constant 0 : index
    %c0_2 = arith.constant 0 : index
    %1 = vector.load %arg1[%c0_1, %c0_2] : memref<32x128xf32, #tpu.memory_space<vmem>>, vector<32x128xf32>
    %cst = arith.constant dense<0.000000e+00> : vector<8x128xf32>
    %2 = tpu.matmul %0, %1, %cst {dimension_numbers = #tpu.dot_dimension_numbers<[1], [0], [0], [1], [0, 0, 1, 1], [], []>} : vector<8x32xf32>, vector<32x128xf32>, vector<8x128xf32> -> vector<8x128xf32>
    %c0_3 = arith.constant 0 : index
    %c0_4 = arith.constant 0 : index
    %3 = vector.load %arg2[%c0_3, %c0_4] : memref<1x128xf32, #tpu.memory_space<vmem>>, vector<1x128xf32>
    %4 = vector.broadcast %3 : vector<1x128xf32> to vector<8x128xf32>
    %5 = arith.addf %2, %4 : vector<8x128xf32>
    %cst_5 = arith.constant 0.000000e+00 : f32
    %6 = vector.broadcast %cst_5 : f32 to vector<8x128xf32>
    %7 = arith.maximumf %5, %6 : vector<8x128xf32>
    %c0_6 = arith.constant 0 : index
    %c0_7 = arith.constant 0 : index
    %8 = vector.load %arg3[%c0_6, %c0_7] : memref<128x128xf32, #tpu.memory_space<vmem>>, vector<128x128xf32>
    %cst_8 = arith.constant dense<0.000000e+00> : vector<8x128xf32>
    %9 = tpu.matmul %7, %8, %cst_8 {dimension_numbers = #tpu.dot_dimension_numbers<[1], [0], [0], [1], [0, 0, 1, 1], [], []>} : vector<8x128xf32>, vector<128x128xf32>, vector<8x128xf32> -> vector<8x128xf32>
    %c0_9 = arith.constant 0 : index
    %c0_10 = arith.constant 0 : index
    %10 = vector.load %arg4[%c0_9, %c0_10] : memref<1x128xf32, #tpu.memory_space<vmem>>, vector<1x128xf32>
    %11 = vector.broadcast %10 : vector<1x128xf32> to vector<8x128xf32>
    %12 = arith.addf %9, %11 : vector<8x128xf32>
    %c0_11 = arith.constant 0 : index
    %c0_12 = arith.constant 0 : index
    %13 = vector.load %arg5[%c0_11, %c0_12] : memref<8x128xf32, #tpu.memory_space<vmem>>, vector<8x128xf32>
    tpu.vector_store %arg5[%c0_11, %c0_12], %12 {strides = array<i32>} : memref<8x128xf32, #tpu.memory_space<vmem>>, vector<8x128xf32>,
    return
  }
}

</mosaic_0001>

<llo_original>
// kernel: vd_linear_1L_forward.1
$region0: #{vd_linear_1L_forward.1}
  #allocation0 [shape = 'u32[]', space=smem, size = 0x4, offset = 0x4, fixed_abs, tag = 'smem constant byte address 0x4 - core index']
  #allocation1 [shape = 'u32[144,128]{1,0:T(1,128)}', space=vmem, size = 0x12000, scoped, tag = 'internal scratch']
  %s0 = inlined_call_operand.vmem [shape: f32[8,32], index: 0, kind: input, shape index: {}]
  %s1 = inlined_call_operand.vmem [shape: f32[32,128], index: 1, kind: input, shape index: {}]
  %s2 = inlined_call_operand.vmem [shape: f32[1,128], index: 2, kind: input, shape index: {}]
  %s3 = inlined_call_operand.hbm [shape: f32[128,128], index: 3, kind: input, shape index: {}]
  %s4 = inlined_call_operand.vmem [shape: f32[1,128], index: 4, kind: input, shape index: {}]
  %s5 = inlined_call_operand.hbm [shape: f32[8,128], index: 5, kind: output, shape index: {}]
  %s6 = sld [smem:[#allocation0]]
  $region34: #{vd_linear_1L_forward.1} parent=0
    _
  %s8 = ssub.s32 1, %s6
  %s9 = scalar_select 0, %s8, %s6
  $region1: #{vd_linear_1L_forward.1} parent=0
    #allocation2 [shape = 'u8[65536]{0}', space=vmem, size = 0x10000, scoped, tag = 'input window, operand 3, single buffered']
    #allocation3 [shape = 's32[1]{0}', space=sflag, size = 0x4, scoped, tag = 'scoped memory for vd_linear_1L_forward.1']
    #allocation4 [shape = 's32[1]{0}', space=sflag, size = 0x4, scoped, tag = 'scoped memory for vd_linear_1L_forward.1']
    #allocation5 [shape = 'u8[4096]{0}', space=vmem, size = 0x1000, scoped, tag = 'output window, operand 0, single buffered']
    %10 = vsyncpa [#allocation3], 0
    %11 = vsyncpa [#allocation4], 0
    // Predicated region
    $region2: #{vd_linear_1L_forward.1} parent=1 // pred_check
      _
    $region3: #{vd_linear_1L_forward.1} parent=1 // pred_check_branch
      %13 = sbr.rel (0) target = $region5
    $region4: #{vd_linear_1L_forward.1} parent=1 // pred_region
      _
    $region5: #{vd_linear_1L_forward.1} parent=1 // pred_fallthru
      _
    // Predicated region
    $region6: #{vd_linear_1L_forward.1} parent=1 // pred_check
      _
    $region7: #{vd_linear_1L_forward.1} parent=1 // pred_check_branch
      %15 = sbr.rel (0) target = $region9
    $region8: #{vd_linear_1L_forward.1} parent=1 // pred_region
      _
    $region9: #{vd_linear_1L_forward.1} parent=1 // pred_fallthru
      _
    // Predicated region
    $region10: #{vd_linear_1L_forward.1} parent=1 // pred_check
      _
    $region11: #{vd_linear_1L_forward.1} parent=1 // pred_check_branch
      %17 = sbr.rel (0) target = $region13
    $region12: #{vd_linear_1L_forward.1} parent=1 // pred_region
      _
    $region13: #{vd_linear_1L_forward.1} parent=1 // pred_fallthru
      _
    // Predicated region
    $region14: #{vd_linear_1L_forward.1} parent=1 // pred_check
      _
    $region15: #{vd_linear_1L_forward.1} parent=1 // pred_check_branch
      %19 = sbr.rel (0) target = $region17
    $region16: #{vd_linear_1L_forward.1} parent=1 // pred_region
      %s21 = ssub.s32 2048, 2048
      %22 = vsyncadd [#allocation3], %s21
      %s23 = sshll.u32 [#allocation2], 4
      %s24 = int_to_ptr.vmem [resolvable:$true] %s23
      %29 = dma.hbm_to_vmem [thread:$0]  %s3, 2048, %s24, [#allocation3], 128, 128, 8
    $region17: #{vd_linear_1L_forward.1} parent=1 // pred_fallthru
      _
    // Predicated region
    $region18: #{vd_linear_1L_forward.1} parent=1 // pred_check
      _
    $region19: #{vd_linear_1L_forward.1} parent=1 // pred_check_branch
      %31 = sbr.rel (0) target = $region21
    $region20: #{vd_linear_1L_forward.1} parent=1 // pred_region
      _
    $region21: #{vd_linear_1L_forward.1} parent=1 // pred_fallthru
      _
    // Predicated region
    $region22: #{vd_linear_1L_forward.1} parent=1 // pred_check
      _
    $region23: #{vd_linear_1L_forward.1} parent=1 // pred_check_branch
      %33 = sbr.rel (0) target = $region25
    $region24: #{vd_linear_1L_forward.1} parent=1 // pred_region
      %34 = dma.done [#allocation3], 2048
    $region25: #{vd_linear_1L_forward.1} parent=1 // pred_fallthru
      _
    %v35 = vld [vmem:[%s0] sm:$0xff]
    %v36 = vld [vmem:[%s1] sm:$0xff]
    %v37 = vld [vmem:[%s1 + $0x8] sm:$0xff]
    %v38 = vld [vmem:[%s1 + $0x10] sm:$0xff]
    %v39 = vld [vmem:[%s1 + $0x18] sm:$0xff]
    %v40 = vld [vmem:[%s2] sm:$0x1]
    %v42 = vlaneseq
    %v43 = vshrl.u32 %v42, 7
    %v44 = vsub.s32 0, %v43
    %v45 = vrot.slane %v40, %v44
    %vm47 = vcmask 261120
    %v49 = vsel %vm47, %v35, 0
    %51 = vmatprep.subr.mxu0 0.0
    %52 = vmatpush1.msra.mxu0 0.0
    %53 = vmatprep.subr.mxu0 0.0
    %54 = vmatpush1.msra.mxu0 0.0
    %55 = vmatprep.subr.mxu0 0.0
    %56 = vmatpush1.msra.mxu0 0.0
    %57 = vmatprep.subr.mxu0 0.0
    %58 = vmatpush1.msra.mxu0 0.0
    %59 = vmatprep.subr.mxu0 0.0
    %60 = vmatpush1.msra.mxu0 0.0
    %61 = vmatprep.subr.mxu0 0.0
    %62 = vmatpush1.msra.mxu0 0.0
    %63 = vmatprep.subr.mxu0 0.0
    %64 = vmatpush1.msra.mxu0 0.0
    %65 = vmatprep.subr.mxu0 0.0
    %66 = vmatpush1.msra.mxu0 0.0
    %67 = vmatprep.subr.mxu0 0.0
    %68 = vmatpush1.msra.mxu0 0.0
    %69 = vmatprep.subr.mxu0 0.0
    %70 = vmatpush1.msra.mxu0 0.0
    %71 = vmatprep.subr.mxu0 0.0
    %72 = vmatpush1.msra.mxu0 0.0
    %73 = vmatprep.subr.mxu0 0.0
    %74 = vmatpush1.msra.mxu0 0.0
    %75 = vmatprep.subr.mxu0 0.0
    %76 = vmatpush1.msra.mxu0 %v39
    %77 = vmatprep.subr.mxu0 0.0
    %78 = vmatpush1.msra.mxu0 %v38
    %79 = vmatprep.subr.mxu0 0.0
    %80 = vmatpush1.msra.mxu0 %v37
    %81 = vmatprep.subr.mxu0 0.0
    %82 = vmatpush1.msra.mxu0 %v36
    %83 = vmatprep.subr.mxu0 0.0
    %84 = vmatpush2.msra.mxu0 0.0
    %85 = vmatprep.subr.mxu0 0.0
    %86 = vmatpush2.msra.mxu0 0.0
    %87 = vmatprep.subr.mxu0 0.0
    %88 = vmatpush2.msra.mxu0 0.0
    %89 = vmatprep.subr.mxu0 0.0
    %90 = vmatpush2.msra.mxu0 0.0
    %91 = vmatprep.subr.mxu0 0.0
    %92 = vmatpush2.msra.mxu0 0.0
    %93 = vmatprep.subr.mxu0 0.0
    %94 = vmatpush2.msra.mxu0 0.0
    %95 = vmatprep.subr.mxu0 0.0
    %96 = vmatpush2.msra.mxu0 0.0
    %97 = vmatprep.subr.mxu0 0.0
    %98 = vmatpush2.msra.mxu0 0.0
    %99 = vmatprep.subr.mxu0 0.0
    %100 = vmatpush2.msra.mxu0 0.0
    %101 = vmatprep.subr.mxu0 0.0
    %102 = vmatpush2.msra.mxu0 0.0
    %103 = vmatprep.subr.mxu0 0.0
    %104 = vmatpush2.msra.mxu0 0.0
    %105 = vmatprep.subr.mxu0 0.0
    %106 = vmatpush2.msra.mxu0 0.0
    %107 = vmatprep.subr.mxu0 0.0
    %108 = vmatpush2.msra.mxu0 0.0
    %109 = vmatprep.subr.mxu0 0.0
    %110 = vmatpush2.msra.mxu0 0.0
    %111 = vmatprep.subr.mxu0 0.0
    %112 = vmatpush2.msra.mxu0 0.0
    %113 = vmatprep.subr.mxu0 0.0
    %114 = vmatpush2.msra.mxu0 0.0
    %115 = vmatprep.mubr.f32.mxu0 0.0
    %116 = vmatmul.mubr.f32.gmra.mxu0 %v49
    %v117 = vpop.f32.mrf.mxu0
    %v118 = vadd.f32 %v45, %v117
    %v119 = vpop.f32.mrf.mxu0
    %120 = vdwg.mxu0
    %v121 = vmax.f32 %v118, 0.0
    %v122 = vld [vmem:[#allocation2] sm:$0xff]
    %v123 = vld [vmem:[#allocation2 + $0x8] sm:$0xff]
    %v124 = vld [vmem:[#allocation2 + $0x10] sm:$0xff]
    %v125 = vld [vmem:[#allocation2 + $0x18] sm:$0xff]
    %v126 = vld [vmem:[#allocation2 + $0x20] sm:$0xff]
    %v127 = vld [vmem:[#allocation2 + $0x28] sm:$0xff]
    %v128 = vld [vmem:[#allocation2 + $0x30] sm:$0xff]
    %v129 = vld [vmem:[#allocation2 + $0x38] sm:$0xff]
    %v130 = vld [vmem:[#allocation2 + $0x40] sm:$0xff]
    %v131 = vld [vmem:[#allocation2 + $0x48] sm:$0xff]
    %v132 = vld [vmem:[#allocation2 + $0x50] sm:$0xff]
    %v133 = vld [vmem:[#allocation2 + $0x58] sm:$0xff]
    %v134 = vld [vmem:[#allocation2 + $0x60] sm:$0xff]
    %v135 = vld [vmem:[#allocation2 + $0x68] sm:$0xff]
    %v136 = vld [vmem:[#allocation2 + $0x70] sm:$0xff]
    %v137 = vld [vmem:[#allocation2 + $0x78] sm:$0xff]
    %v138 = vld [vmem:[%s4] sm:$0x1]
    %v140 = vlaneseq
    %v141 = vshrl.u32 %v140, 7
    %v142 = vsub.s32 0, %v141
    %v143 = vrot.slane %v138, %v142
    %145 = vmatprep.subr.mxu0 0.0
    %146 = vmatpush1.msra.mxu0 %v137
    %147 = vmatprep.subr.mxu0 0.0
    %148 = vmatpush1.msra.mxu0 %v136
    %149 = vmatprep.subr.mxu0 0.0
    %150 = vmatpush1.msra.mxu0 %v135
    %151 = vmatprep.subr.mxu0 0.0
    %152 = vmatpush1.msra.mxu0 %v134
    %153 = vmatprep.subr.mxu0 0.0
    %154 = vmatpush1.msra.mxu0 %v133
    %155 = vmatprep.subr.mxu0 0.0
    %156 = vmatpush1.msra.mxu0 %v132
    %157 = vmatprep.subr.mxu0 0.0
    %158 = vmatpush1.msra.mxu0 %v131
    %159 = vmatprep.subr.mxu0 0.0
    %160 = vmatpush1.msra.mxu0 %v130
    %161 = vmatprep.subr.mxu0 0.0
    %162 = vmatpush1.msra.mxu0 %v129
    %163 = vmatprep.subr.mxu0 0.0
    %164 = vmatpush1.msra.mxu0 %v128
    %165 = vmatprep.subr.mxu0 0.0
    %166 = vmatpush1.msra.mxu0 %v127
    %167 = vmatprep.subr.mxu0 0.0
    %168 = vmatpush1.msra.mxu0 %v126
    %169 = vmatprep.subr.mxu0 0.0
    %170 = vmatpush1.msra.mxu0 %v125
    %171 = vmatprep.subr.mxu0 0.0
    %172 = vmatpush1.msra.mxu0 %v124
    %173 = vmatprep.subr.mxu0 0.0
    %174 = vmatpush1.msra.mxu0 %v123
    %175 = vmatprep.subr.mxu0 0.0
    %176 = vmatpush1.msra.mxu0 %v122
    %177 = vmatprep.subr.mxu0 0.0
    %178 = vmatpush2.msra.mxu0 0.0
    %179 = vmatprep.subr.mxu0 0.0
    %180 = vmatpush2.msra.mxu0 0.0
    %181 = vmatprep.subr.mxu0 0.0
    %182 = vmatpush2.msra.mxu0 0.0
    %183 = vmatprep.subr.mxu0 0.0
    %184 = vmatpush2.msra.mxu0 0.0
    %185 = vmatprep.subr.mxu0 0.0
    %186 = vmatpush2.msra.mxu0 0.0
    %187 = vmatprep.subr.mxu0 0.0
    %188 = vmatpush2.msra.mxu0 0.0
    %189 = vmatprep.subr.mxu0 0.0
    %190 = vmatpush2.msra.mxu0 0.0
    %191 = vmatprep.subr.mxu0 0.0
    %192 = vmatpush2.msra.mxu0 0.0
    %193 = vmatprep.subr.mxu0 0.0
    %194 = vmatpush2.msra.mxu0 0.0
    %195 = vmatprep.subr.mxu0 0.0
    %196 = vmatpush2.msra.mxu0 0.0
    %197 = vmatprep.subr.mxu0 0.0
    %198 = vmatpush2.msra.mxu0 0.0
    %199 = vmatprep.subr.mxu0 0.0
    %200 = vmatpush2.msra.mxu0 0.0
    %201 = vmatprep.subr.mxu0 0.0
    %202 = vmatpush2.msra.mxu0 0.0
    %203 = vmatprep.subr.mxu0 0.0
    %204 = vmatpush2.msra.mxu0 0.0
    %205 = vmatprep.subr.mxu0 0.0
    %206 = vmatpush2.msra.mxu0 0.0
    %207 = vmatprep.subr.mxu0 0.0
    %208 = vmatpush2.msra.mxu0 0.0
    %209 = vmatprep.mubr.f32.mxu0 0.0
    %210 = vmatmul.mubr.f32.gmra.mxu0 %v121
    %v211 = vpop.f32.mrf.mxu0
    %v212 = vadd.f32 %v143, %v211
    %v213 = vpop.f32.mrf.mxu0
    %214 = vdwg.mxu0
    %215 = vst [vmem:[#allocation5] sm:$0xff] %v212
    // Predicated region
    $region26: #{vd_linear_1L_forward.1} parent=1 // pred_check
      _
    $region27: #{vd_linear_1L_forward.1} parent=1 // pred_check_branch
      %217 = sbr.rel (0) target = $region29
    $region28: #{vd_linear_1L_forward.1} parent=1 // pred_region
      %s219 = ssub.s32 128, 128
      %220 = vsyncadd [#allocation4], %s219
      %s222 = sshll.u32 [#allocation5], 4
      %s223 = int_to_ptr.vmem [resolvable:$true] %s222
      %225 = dma.vmem_to_hbm [thread:$0]  %s223, 128, %s5, [#allocation4]
    $region29: #{vd_linear_1L_forward.1} parent=1 // pred_fallthru
      _
    // Predicated region
    $region30: #{vd_linear_1L_forward.1} parent=1 // pred_check
      _
    $region31: #{vd_linear_1L_forward.1} parent=1 // pred_check_branch
      %227 = sbr.rel (0) target = $region33
    $region32: #{vd_linear_1L_forward.1} parent=1 // pred_region
      %228 = dma.done [#allocation4], 128
    $region33: #{vd_linear_1L_forward.1} parent=1 // pred_fallthru
      _
    %229 = vsyncpa [#allocation3], 1
    %230 = vsyncpa [#allocation4], 1

</llo_original>
